<compile_context>
chip_gen: v7x
topology: tpu7x:2x2x1
jax: 0.10.0
libtpu: 0.0.40
codegen_flags: <defaults>
</compile_context>

<pallas_src>
import jax
import jax.numpy as jnp
from jax.experimental import pallas as pl
from jax.experimental.pallas import tpu as pltpu


def _round_up(x, m):
    return ((x + m - 1) // m) * m


def _sublane_multiple(itemsize):
    # Packed-row width of a vreg tile: f32 -> 8, bf16 -> 16, int8/fp8 -> 32.
    return 8 * max(1, 4 // itemsize)


def _tile_bytes(rows, cols, itemsize):
    # VMEM bytes of ONE buffer of a (rows, cols) tile after (sublane, 128-lane) padding.
    return _round_up(rows, _sublane_multiple(itemsize)) * _round_up(cols, 128) * itemsize


def _vmem_capacity_bytes():
    # Physical VMEM per TensorCore: 128 MiB on v5e/v6e, 64 MiB on v7x.
    try:
        info = pltpu.get_tpu_info()
        cap = getattr(info, "vmem_capacity_bytes", None)
        if cap:
            return int(cap)
    except Exception:
        pass
    return 64 * 1024 * 1024  # conservative default = v7x per-TensorCore VMEM


# ----------------------------------------------------------------------------- kernels ---
def _fl_kernel_carry(x_ref, w1t_ref, w2t_ref, b_ref, o_ref, h_ref):
    # x_ref:   (TM, IN)    row tile of x (block index constant across j)
    # w1t_ref: (IN, RANK)  whole factor1 weight, pre-transposed (constant, single-buffered)
    # w2t_ref: (RANK, TN)  factor2 weight tile, pre-transposed
    # b_ref:   (1, TN)     factor2 bias tile
    # o_ref:   (TM, TN)    output tile
    # h_ref:   (TM, RANK)  scratch in the *weight* dtype holding x @ W1^T for this row tile
    #
    # Correctness invariant: the out_features axis (j) must be the innermost,
    # sequentially-executed ("arbitrary") grid axis and the x block index must not depend
    # on j, otherwise h_ref would be stale for j > 0.  The wrapper hard-codes both.
    j = pl.program_id(1)

    @pl.when(j == 0)
    def _():
        # First matmul once per row tile; the cast to the second-matmul operand dtype is
        # hoisted here (paid once, not per j step).
        h32 = jnp.dot(x_ref[...], w1t_ref[...], preferred_element_type=jnp.float32)
        h_ref[...] = h32.astype(h_ref.dtype)

    y = jnp.dot(h_ref[...], w2t_ref[...], preferred_element_type=jnp.float32) + b_ref[...]
    o_ref[...] = y.astype(o_ref.dtype)


def _fl_kernel_recompute(x_ref, w1t_ref, w2t_ref, b_ref, o_ref):
    # Same math, but h is recomputed for every (i, j) tile, so there is no cross-j carry
    # and BOTH grid axes are independent ("parallel", "parallel").  Used when the batch
    # axis has a single tile: on v7x this lets the out_features axis be sharded across the
    # two TensorCores instead of leaving one idle.  The redundant matmul1 costs only
    # 2*tm*in*rank extra flops per step (rank is small) and is typically hidden under the
    # W2-tile DMA.
    h = jnp.dot(x_ref[...], w1t_ref[...], preferred_element_type=jnp.float32)
    h = h.astype(w2t_ref.dtype)
    y = jnp.dot(h, w2t_ref[...], preferred_element_type=jnp.float32) + b_ref[...]
    o_ref[...] = y.astype(o_ref.dtype)


# ----------------------------------------------------------------------------- wrapper ---
def factorized_linear(x, w1t, w2t, b, *, tm=None, tn=None):
    """Computes factor2(factor1(x)) == (x @ w1t) @ w2t + b.

    x:   (B, in_features)
    w1t: (in_features, rank)    = factor1.weight.T  (store pre-transposed!)
    w2t: (rank, out_features)   = factor2.weight.T  (store pre-transposed!)
    b:   (out_features,)
    """
    B, in_features = x.shape
    rank = w1t.shape[1]
    out_features = w2t.shape[1]
    assert w1t.shape == (in_features, rank)
    assert w2t.shape == (rank, out_features)
    assert b.shape == (out_features,)

    sx = jnp.dtype(x.dtype).itemsize
    sw = jnp.dtype(w2t.dtype).itemsize
    sb = jnp.dtype(b.dtype).itemsize
    sub = _sublane_multiple(sx)

    # --- Lane-dense out_features: pad to a multiple of 128 so stores are unmasked and the
    # output tile footprint stays bounded (no full-dim fallback tile).
    Np = _round_up(out_features, 128)
    if Np != out_features:
        # TODO(synk): in production, pad W2^T / bias once at parameter-setup time.
        w2t = jnp.pad(w2t, ((0, 0), (0, Np - out_features)))
        b = jnp.pad(b, (0, Np - out_features))
    b2d = b.reshape(1, Np)

    # --- VMEM budget: 3/4 of physical for tile selection; request capped at 7/8.
    phys = _vmem_capacity_bytes()
    budget = (phys * 3) // 4

    def footprint(tm_, tn_):
        return (
            2 * _tile_bytes(tm_, in_features, sx)      # x tile (double-buffered)
            + 1 * _tile_bytes(in_features, rank, sw)   # whole W1^T, Buffered(1)
            + 2 * _tile_bytes(rank, tn_, sw)           # W2^T tile (double-buffered)
            + 2 * _tile_bytes(1, tn_, sb)              # bias tile (pads to 8 sublanes)
            + 2 * _tile_bytes(tm_, tn_, sx)            # output tile (double-buffered)
            + 1 * _tile_bytes(tm_, rank, sw)           # h scratch (weight dtype)
            + (1 << 20)                                # Mosaic internal-scratch allowance
        )

    # --- Tile selection ---------------------------------------------------------------
    if tm is None:
        tm = min(_round_up(B, sub), 512)
        # For large in_features the (tm, in_features) x tile + whole W1^T dominate VMEM
        # (hits v7x's 64 MiB ~2x sooner than v5e/v6e); shrink tm toward 128 first.
        while tm > 128 and footprint(tm, 128) > budget:
            tm = max(128, _round_up(tm // 2, sub))
        tm_flexible = True
    else:
        tm = _round_up(tm, sub)
        tm_flexible = False

    if tn is None:
        # Largest multiple of 128 (<= 1024) dividing the padded out_features that fits.
        cands = [c for c in range(128, min(Np, 1024) + 1, 128) if Np % c == 0]
        tn = 128
        for c in sorted(cands, reverse=True):
            if footprint(tm, c) <= budget:
                tn = c
                break
    else:
        assert tn % 128 == 0 and Np % tn == 0, (
            "tn must be a multiple of 128 that divides the padded out_features")

    # Last resort for very large in_features: shrink tm down to the sublane minimum.
    while tm_flexible and tm > sub and footprint(tm, tn) > budget:
        tm = max(sub, _round_up(tm // 2, sub))
    # TODO(synk): if even the minimum tiles exceed the budget (huge in_features * rank),
    # add a K-tile over in_features that accumulates into h_ref.

    # --- Pad batch so any B works, build grid, pick kernel variant ----------------------
    Bp = _round_up(B, tm)
    x_p = jnp.pad(x, ((0, Bp - B), (0, 0))) if Bp != B else x
    grid = (Bp // tm, Np // tn)

    # Megacore coverage: single row tile but several out tiles -> drop the h carry so the
    # out_features axis can be "parallel" (v7x's 2nd TensorCore gets work).
    use_recompute = grid[0] == 1 and grid[1] > 1

    est = footprint(tm, tn)
    vmem_limit = max(16 << 20, min((phys * 7) // 8, est + (4 << 20)))

    if use_recompute:
        kernel = _fl_kernel_recompute
        scratch_shapes = []
        dim_sem = ("parallel", "parallel")
    else:
        kernel = _fl_kernel_carry
        scratch_shapes = [pltpu.VMEM((tm, rank), w2t.dtype)]
        # j axis MUST stay the innermost "arbitrary" axis for the h-scratch carry.
        dim_sem = ("parallel", "arbitrary")

    # TODO(synk): for rank << 128, padding rank to 128 in w1t/w2t makes h lane-dense; only
    # worth it when the extra W2 re-stream traffic stays small — not applied here.

    out = pl.pallas_call(
        kernel,
        out_shape=jax.ShapeDtypeStruct((Bp, Np), x.dtype),
        grid_spec=pltpu.PrefetchScalarGridSpec(
            num_scalar_prefetch=0,
            grid=grid,
            in_specs=[
                pl.BlockSpec((tm, in_features), lambda i, j: (i, 0)),
                # Constant block index across the whole grid -> single-buffer it.
                pl.BlockSpec((in_features, rank), lambda i, j: (0, 0),
                             pipeline_mode=pl.Buffered(1)),
                pl.BlockSpec((rank, tn), lambda i, j: (0, j)),
                pl.BlockSpec((1, tn), lambda i, j: (0, j)),
            ],
            out_specs=pl.BlockSpec((tm, tn), lambda i, j: (i, j)),
            scratch_shapes=scratch_shapes,
        ),
        compiler_params=pltpu.CompilerParams(
            dimension_semantics=dim_sem,
            vmem_limit_bytes=int(vmem_limit),
        ),
    )(x_p, w1t, w2t, b2d)

    if Bp != B or Np != out_features:
        out = out[:B, :out_features]
    return out


# ----------------------------------------------------------------------------- test ------
if __name__ == "__main__":
    key = jax.random.PRNGKey(0)

    def make_params(k, batch, in_features, out_features, rank, dtype=jnp.float32):
        kx, k1, k2, kb = jax.random.split(k, 4)
        bound1 = 1.0 / (in_features ** 0.5)
        bound2 = 1.0 / (rank ** 0.5)
        x = jax.random.normal(kx, (batch, in_features), dtype=dtype)
        w1 = jax.random.uniform(k1, (rank, in_features), minval=-bound1, maxval=bound1, dtype=dtype)
        w2 = jax.random.uniform(k2, (out_features, rank), minval=-bound2, maxval=bound2, dtype=dtype)
        b = jax.random.uniform(kb, (out_features,), minval=-bound2, maxval=bound2, dtype=dtype)
        return x, w1, w2, b

    cases = [
        # (batch, in_features, out_features, rank, tn_override)
        (16, 64, 128, 32, None),   # FactorizedLinear defaults -> carry kernel, single out tile
        (8, 48, 200, 32, None),    # out_features not a multiple of 128 -> padded lane-dense path
        (8, 64, 256, 32, 128),     # grid = (1, 2) -> recompute kernel (megacore / parallel-j path)
    ]

    for idx, (batch, in_f, out_f, rank, tn_over) in enumerate(cases):
        key, sub_key = jax.random.split(key)
        x, w1, w2, b = make_params(sub_key, batch, in_f, out_f, rank)

        # Pre-transpose ONCE at parameter-setup time (weight-stationary storage); the
        # kernel wrapper never transposes on the hot path.
        w1t = jnp.asarray(w1.T)   # (in_features, rank)
        w2t = jnp.asarray(w2.T)   # (rank, out_features)

        out = factorized_linear(x, w1t, w2t, b, tn=tn_over)
        out = jax.block_until_ready(out)

        # Pure-JAX reference (same semantics as torch: x @ W1.T @ W2.T + b).
        ref = (x @ w1.T) @ w2.T + b
        assert out.shape == (batch, out_f), (idx, out.shape)
        err = float(jnp.max(jnp.abs(out - ref)))
        assert jnp.allclose(out, ref, atol=1e-4, rtol=1e-4), (idx, err)

    print("KERNEL_OK")
</pallas_src>

<mosaic_0001>
module attributes {stable_mosaic.version = 11 : i64} {
  func.func @_fl_kernel_carry(%arg0: i32, %arg1: i32, %arg2: memref<16x64xf32, #tpu.memory_space<vmem>>, %arg3: memref<64x32xf32, #tpu.memory_space<vmem>>, %arg4: memref<32x128xf32, #tpu.memory_space<vmem>>, %arg5: memref<1x128xf32, #tpu.memory_space<vmem>>, %arg6: memref<16x128xf32, #tpu.memory_space<vmem>>, %arg7: memref<16x32xf32, #tpu.memory_space<vmem>>) attributes {dimension_semantics = [#tpu.dimension_semantics<parallel>, #tpu.dimension_semantics<arbitrary>], iteration_bounds = array<i64: 1, 1>, scalar_prefetch = 0 : i64, scratch_operands = 1 : i64, tpu.core_type = #tpu.core_type<tc>, window_params = [{transform_indices = @transform_0, window_bounds = array<i64: 16, 64>}, {pipeline_mode = #tpu.pipeline_mode<synchronous>, transform_indices = @transform_1, window_bounds = array<i64: 64, 32>}, {transform_indices = @transform_2, window_bounds = array<i64: 32, 128>}, {transform_indices = @transform_3, window_bounds = array<i64: 1, 128>}, {transform_indices = @transform_4, window_bounds = array<i64: 16, 128>}]} {
    %c0_i32 = arith.constant 0 : i32
    %0 = arith.cmpi eq, %arg1, %c0_i32 : i32
    %1 = arith.extui %0 : i1 to i32
    %c0_i32_0 = arith.constant 0 : i32
    %2 = arith.cmpi ne, %1, %c0_i32_0 : i32
    scf.if %2 {
      %c0_8 = arith.constant 0 : index
      %c0_9 = arith.constant 0 : index
      %10 = vector.load %arg2[%c0_8, %c0_9] : memref<16x64xf32, #tpu.memory_space<vmem>>, vector<16x64xf32>
      %c0_10 = arith.constant 0 : index
      %c0_11 = arith.constant 0 : index
      %11 = vector.load %arg3[%c0_10, %c0_11] : memref<64x32xf32, #tpu.memory_space<vmem>>, vector<64x32xf32>
      %cst_12 = arith.constant dense<0.000000e+00> : vector<16x32xf32>
      %12 = tpu.matmul %10, %11, %cst_12 {dimension_numbers = #tpu.dot_dimension_numbers<[1], [0], [0], [1], [0, 0, 1, 1], [], []>} : vector<16x64xf32>, vector<64x32xf32>, vector<16x32xf32> -> vector<16x32xf32>
      %c0_13 = arith.constant 0 : index
      %c0_14 = arith.constant 0 : index
      %13 = vector.load %arg7[%c0_13, %c0_14] : memref<16x32xf32, #tpu.memory_space<vmem>>, vector<16x32xf32>
      tpu.vector_store %arg7[%c0_13, %c0_14], %12 {strides = array<i32>} : memref<16x32xf32, #tpu.memory_space<vmem>>, vector<16x32xf32>,
    } else {
    }
    %c0 = arith.constant 0 : index
    %c0_1 = arith.constant 0 : index
    %3 = vector.load %arg7[%c0, %c0_1] : memref<16x32xf32, #tpu.memory_space<vmem>>, vector<16x32xf32>
    %c0_2 = arith.constant 0 : index
    %c0_3 = arith.constant 0 : index
    %4 = vector.load %arg4[%c0_2, %c0_3] : memref<32x128xf32, #tpu.memory_space<vmem>>, vector<32x128xf32>
    %cst = arith.constant dense<0.000000e+00> : vector<16x128xf32>
    %5 = tpu.matmul %3, %4, %cst {dimension_numbers = #tpu.dot_dimension_numbers<[1], [0], [0], [1], [0, 0, 1, 1], [], []>} : vector<16x32xf32>, vector<32x128xf32>, vector<16x128xf32> -> vector<16x128xf32>
    %c0_4 = arith.constant 0 : index
    %c0_5 = arith.constant 0 : index
    %6 = vector.load %arg5[%c0_4, %c0_5] : memref<1x128xf32, #tpu.memory_space<vmem>>, vector<1x128xf32>
    %7 = vector.broadcast %6 : vector<1x128xf32> to vector<16x128xf32>
    %8 = arith.addf %5, %7 : vector<16x128xf32>
    %c0_6 = arith.constant 0 : index
    %c0_7 = arith.constant 0 : index
    %9 = vector.load %arg6[%c0_6, %c0_7] : memref<16x128xf32, #tpu.memory_space<vmem>>, vector<16x128xf32>
    tpu.vector_store %arg6[%c0_6, %c0_7], %8 {strides = array<i32>} : memref<16x128xf32, #tpu.memory_space<vmem>>, vector<16x128xf32>,
    return
  }
  func.func @transform_0(%arg0: i32, %arg1: i32) -> (i32, i32) {
    %c0_i32 = arith.constant 0 : i32
    %c0_i32_0 = arith.constant 0 : i32
    return %arg0, %c0_i32 : i32, i32
  }
  func.func @transform_1(%arg0: i32, %arg1: i32) -> (i32, i32) {
    %c0_i32 = arith.constant 0 : i32
    %c0_i32_0 = arith.constant 0 : i32
    %c0_i32_1 = arith.constant 0 : i32
    return %c0_i32, %c0_i32_0 : i32, i32
  }
  func.func @transform_2(%arg0: i32, %arg1: i32) -> (i32, i32) {
    %c0_i32 = arith.constant 0 : i32
    %c0_i32_0 = arith.constant 0 : i32
    return %c0_i32, %arg1 : i32, i32
  }
  func.func @transform_3(%arg0: i32, %arg1: i32) -> (i32, i32) {
    %c0_i32 = arith.constant 0 : i32
    %c0_i32_0 = arith.constant 0 : i32
    return %c0_i32, %arg1 : i32, i32
  }
  func.func @transform_4(%arg0: i32, %arg1: i32) -> (i32, i32) {
    %c0_i32 = arith.constant 0 : i32
    return %arg0, %arg1 : i32, i32
  }
}

</mosaic_0001>

<llo_original>
// kernel: tpu_custom_call.1
$region0: #{tpu_custom_call.1}
  #allocation0 [shape = 'u32[]', space=smem, size = 0x4, offset = 0x4, fixed_abs, tag = 'smem constant byte address 0x4 - core index']
  #allocation1 [shape = 'u32[144,128]{1,0:T(1,128)}', space=vmem, size = 0x12000, scoped, tag = 'internal scratch']
  #allocation2 [shape = 'f32[16,32]{1,0:T(8,128)}', space=vmem, size = 0x2000, scoped, tag = 'scratch operand']
  %s0 = inlined_call_operand.vmem [shape: f32[16,64], index: 0, kind: input, shape index: {}]
  %s1 = inlined_call_operand.vmem [shape: f32[64,32], index: 1, kind: input, shape index: {}]
  %s2 = inlined_call_operand.vmem [shape: f32[32,128], index: 2, kind: input, shape index: {}]
  %s3 = inlined_call_operand.vmem [shape: f32[1,128], index: 3, kind: input, shape index: {}]
  %s4 = inlined_call_operand.hbm [shape: f32[16,128], index: 4, kind: output, shape index: {}]
  %s5 = sld [smem:[#allocation0]]
  $region30: #{tpu_custom_call.1} parent=0
    _
  %s7 = ssub.s32 1, %s5
  %s8 = scalar_select 0, %s7, %s5
  $region1: #{tpu_custom_call.1} parent=0
    #allocation3 [shape = 'u8[8192]{0}', space=vmem, size = 0x2000, scoped, tag = 'output window, operand 0, single buffered']
    #allocation4 [shape = 's32[1]{0}', space=sflag, size = 0x4, scoped, tag = 'scoped memory for tpu_custom_call.1']
    %9 = vsyncpa [#allocation4], 0
    // Predicated region
    $region2: #{tpu_custom_call.1} parent=1 // pred_check
      _
    $region3: #{tpu_custom_call.1} parent=1 // pred_check_branch
      %11 = sbr.rel (0) target = $region5
    $region4: #{tpu_custom_call.1} parent=1 // pred_region
      _
    $region5: #{tpu_custom_call.1} parent=1 // pred_fallthru
      _
    // Predicated region
    $region6: #{tpu_custom_call.1} parent=1 // pred_check
      _
    $region7: #{tpu_custom_call.1} parent=1 // pred_check_branch
      %13 = sbr.rel (0) target = $region9
    $region8: #{tpu_custom_call.1} parent=1 // pred_region
      _
    $region9: #{tpu_custom_call.1} parent=1 // pred_fallthru
      _
    // Predicated region
    $region10: #{tpu_custom_call.1} parent=1 // pred_check
      _
    $region11: #{tpu_custom_call.1} parent=1 // pred_check_branch
      %15 = sbr.rel (0) target = $region13
    $region12: #{tpu_custom_call.1} parent=1 // pred_region
      _
    $region13: #{tpu_custom_call.1} parent=1 // pred_fallthru
      _
    // Predicated region
    $region14: #{tpu_custom_call.1} parent=1 // pred_check
      _
    $region15: #{tpu_custom_call.1} parent=1 // pred_check_branch
      %17 = sbr.rel (0) target = $region17
    $region16: #{tpu_custom_call.1} parent=1 // pred_region
      _
    $region17: #{tpu_custom_call.1} parent=1 // pred_fallthru
      _
    %p18 = scmp.eq.s32.totalorder 0, 0
    // Predicated region
    $region18: #{tpu_custom_call.1} parent=1 // pred_check
      %p19 = pneg %p18
    $region19: #{tpu_custom_call.1} parent=1 // pred_check_branch
      %21 = sbr.rel (%p19) target = $region21
    $region20: #{tpu_custom_call.1} parent=1 // pred_region
      %v22 = vld [vmem:[%s0] sm:$0xff]
      %v23 = vld [vmem:[%s0 + $0x8] sm:$0xff]
      %v24 = vld [vmem:[%s1] sm:$0xff]
      %v25 = vld [vmem:[%s1 + $0x8] sm:$0xff]
      %v26 = vld [vmem:[%s1 + $0x10] sm:$0xff]
      %v27 = vld [vmem:[%s1 + $0x18] sm:$0xff]
      %v28 = vld [vmem:[%s1 + $0x20] sm:$0xff]
      %v29 = vld [vmem:[%s1 + $0x28] sm:$0xff]
      %v30 = vld [vmem:[%s1 + $0x30] sm:$0xff]
      %v31 = vld [vmem:[%s1 + $0x38] sm:$0xff]
      %vm32 = vcmask 523264
      %v34 = vsel %vm32, %v22, 0
      %v37 = vsel %vm32, %v23, 0
      %39 = vmatprep.subr.mxu0 0.0
      %40 = vmatpush1.msra.mxu0 %v24
      %41 = vmatprep.subr.mxu0 0.0
      %42 = vmatpush1.msra.mxu0 %v25
      %43 = vmatprep.subr.mxu0 0.0
      %44 = vmatpush1.msra.mxu0 %v26
      %45 = vmatprep.subr.mxu0 0.0
      %46 = vmatpush1.msra.mxu0 %v27
      %47 = vmatprep.subr.mxu0 0.0
      %48 = vmatpush1.msra.mxu0 %v28
      %49 = vmatprep.subr.mxu0 0.0
      %50 = vmatpush1.msra.mxu0 %v29
      %51 = vmatprep.subr.mxu0 0.0
      %52 = vmatpush1.msra.mxu0 %v30
      %53 = vmatprep.subr.mxu0 0.0
      %54 = vmatpush1.msra.mxu0 %v31
      %55 = vmatprep.subr.mxu0 0.0
      %56 = vmatpush1.msra.mxu0 0.0
      %57 = vmatprep.subr.mxu0 0.0
      %58 = vmatpush1.msra.mxu0 0.0
      %59 = vmatprep.subr.mxu0 0.0
      %60 = vmatpush1.msra.mxu0 0.0
      %61 = vmatprep.subr.mxu0 0.0
      %62 = vmatpush1.msra.mxu0 0.0
      %63 = vmatprep.subr.mxu0 0.0
      %64 = vmatpush1.msra.mxu0 0.0
      %65 = vmatprep.subr.mxu0 0.0
      %66 = vmatpush1.msra.mxu0 0.0
      %67 = vmatprep.subr.mxu0 0.0
      %68 = vmatpush1.msra.mxu0 0.0
      %69 = vmatprep.subr.mxu0 0.0
      %70 = vmatpush1.msra.mxu0 0.0
      %71 = vmatprep.subr.mxu0 0.0
      %72 = vmatpush1.msra.mxu0 0.0
      %73 = vmatprep.subr.mxu0 0.0
      %74 = vmatpush1.msra.mxu0 0.0
      %75 = vmatprep.subr.mxu0 0.0
      %76 = vmatpush1.msra.mxu0 0.0
      %77 = vmatprep.subr.mxu0 0.0
      %78 = vmatpush1.msra.mxu0 0.0
      %79 = vmatprep.subr.mxu0 0.0
      %80 = vmatpush1.msra.mxu0 0.0
      %81 = vmatprep.subr.mxu0 0.0
      %82 = vmatpush1.msra.mxu0 0.0
      %83 = vmatprep.subr.mxu0 0.0
      %84 = vmatpush1.msra.mxu0 0.0
      %85 = vmatprep.subr.mxu0 0.0
      %86 = vmatpush1.msra.mxu0 0.0
      %87 = vmatprep.subr.mxu0 0.0
      %88 = vmatpush1.msra.mxu0 0.0
      %89 = vmatprep.subr.mxu0 0.0
      %90 = vmatpush1.msra.mxu0 0.0
      %91 = vmatprep.subr.mxu0 0.0
      %92 = vmatpush1.msra.mxu0 0.0
      %93 = vmatprep.subr.mxu0 0.0
      %94 = vmatpush1.msra.mxu0 0.0
      %95 = vmatprep.subr.mxu0 0.0
      %96 = vmatpush1.msra.mxu0 0.0
      %97 = vmatprep.subr.mxu0 0.0
      %98 = vmatpush1.msra.mxu0 0.0
      %99 = vmatprep.subr.mxu0 0.0
      %100 = vmatpush1.msra.mxu0 0.0
      %101 = vmatprep.subr.mxu0 0.0
      %102 = vmatpush1.msra.mxu0 0.0
      %103 = vmatprep.mubr.f32.mxu0 0.0
      %104 = vmatmul.mubr.f32.gmra.mrb[0].mxu0 %v34
      %v105 = vpop.f32.mrb[0].mxu0
      %v106 = vadd.f32 0.0, %v105
      %v107 = vpop.f32.mrb[0].mxu0
      %108 = vmatprep.mubr.f32.mxu0 0.0
      %109 = vmatmul.mubr.f32.gmra.mrb[0].mxu0 %v37
      %v110 = vpop.f32.mrb[0].mxu0
      %v111 = vadd.f32 0.0, %v110
      %v112 = vpop.f32.mrb[0].mxu0
      %113 = vdwg.mxu0
      %vm114 = vcmask 261120
      %115 = vst.msk [vmem:[#allocation2] sm:$0xff] %vm114, %v106
      %116 = vst.msk [vmem:[#allocation2 + $0x8] sm:$0xff] %vm114, %v111
    $region21: #{tpu_custom_call.1} parent=1 // pred_fallthru
      _
    %v117 = vld [vmem:[#allocation2] sm:$0xff]
    %v118 = vld [vmem:[#allocation2 + $0x8] sm:$0xff]
    %v119 = vld [vmem:[%s2] sm:$0xff]
    %v120 = vld [vmem:[%s2 + $0x8] sm:$0xff]
    %v121 = vld [vmem:[%s2 + $0x10] sm:$0xff]
    %v122 = vld [vmem:[%s2 + $0x18] sm:$0xff]
    %v123 = vld [vmem:[%s3] sm:$0x1]
    %v125 = vlaneseq
    %v126 = vshrl.u32 %v125, 7
    %v127 = vsub.s32 0, %v126
    %v128 = vrot.slane %v123, %v127
    %vm130 = vcmask 261120
    %v132 = vsel %vm130, %v117, 0
    %v135 = vsel %vm130, %v118, 0
    %137 = vmatprep.subr.mxu0 0.0
    %138 = vmatpush1.msra.mxu0 %v119
    %139 = vmatprep.subr.mxu0 0.0
    %140 = vmatpush1.msra.mxu0 %v120
    %141 = vmatprep.subr.mxu0 0.0
    %142 = vmatpush1.msra.mxu0 %v121
    %143 = vmatprep.subr.mxu0 0.0
    %144 = vmatpush1.msra.mxu0 %v122
    %145 = vmatprep.subr.mxu0 0.0
    %146 = vmatpush1.msra.mxu0 0.0
    %147 = vmatprep.subr.mxu0 0.0
    %148 = vmatpush1.msra.mxu0 0.0
    %149 = vmatprep.subr.mxu0 0.0
    %150 = vmatpush1.msra.mxu0 0.0
    %151 = vmatprep.subr.mxu0 0.0
    %152 = vmatpush1.msra.mxu0 0.0
    %153 = vmatprep.subr.mxu0 0.0
    %154 = vmatpush1.msra.mxu0 0.0
    %155 = vmatprep.subr.mxu0 0.0
    %156 = vmatpush1.msra.mxu0 0.0
    %157 = vmatprep.subr.mxu0 0.0
    %158 = vmatpush1.msra.mxu0 0.0
    %159 = vmatprep.subr.mxu0 0.0
    %160 = vmatpush1.msra.mxu0 0.0
    %161 = vmatprep.subr.mxu0 0.0
    %162 = vmatpush1.msra.mxu0 0.0
    %163 = vmatprep.subr.mxu0 0.0
    %164 = vmatpush1.msra.mxu0 0.0
    %165 = vmatprep.subr.mxu0 0.0
    %166 = vmatpush1.msra.mxu0 0.0
    %167 = vmatprep.subr.mxu0 0.0
    %168 = vmatpush1.msra.mxu0 0.0
    %169 = vmatprep.subr.mxu0 0.0
    %170 = vmatpush1.msra.mxu0 0.0
    %171 = vmatprep.subr.mxu0 0.0
    %172 = vmatpush1.msra.mxu0 0.0
    %173 = vmatprep.subr.mxu0 0.0
    %174 = vmatpush1.msra.mxu0 0.0
    %175 = vmatprep.subr.mxu0 0.0
    %176 = vmatpush1.msra.mxu0 0.0
    %177 = vmatprep.subr.mxu0 0.0
    %178 = vmatpush1.msra.mxu0 0.0
    %179 = vmatprep.subr.mxu0 0.0
    %180 = vmatpush1.msra.mxu0 0.0
    %181 = vmatprep.subr.mxu0 0.0
    %182 = vmatpush1.msra.mxu0 0.0
    %183 = vmatprep.subr.mxu0 0.0
    %184 = vmatpush1.msra.mxu0 0.0
    %185 = vmatprep.subr.mxu0 0.0
    %186 = vmatpush1.msra.mxu0 0.0
    %187 = vmatprep.subr.mxu0 0.0
    %188 = vmatpush1.msra.mxu0 0.0
    %189 = vmatprep.subr.mxu0 0.0
    %190 = vmatpush1.msra.mxu0 0.0
    %191 = vmatprep.subr.mxu0 0.0
    %192 = vmatpush1.msra.mxu0 0.0
    %193 = vmatprep.subr.mxu0 0.0
    %194 = vmatpush1.msra.mxu0 0.0
    %195 = vmatprep.subr.mxu0 0.0
    %196 = vmatpush1.msra.mxu0 0.0
    %197 = vmatprep.subr.mxu0 0.0
    %198 = vmatpush1.msra.mxu0 0.0
    %199 = vmatprep.subr.mxu0 0.0
    %200 = vmatpush1.msra.mxu0 0.0
    %201 = vmatprep.mubr.f32.mxu0 0.0
    %202 = vmatmul.mubr.f32.gmra.mrb[0].mxu0 %v132
    %v203 = vpop.f32.mrb[0].mxu0
    %v204 = vadd.f32 %v128, %v203
    %v205 = vpop.f32.mrb[0].mxu0
    %206 = vmatprep.mubr.f32.mxu0 0.0
    %207 = vmatmul.mubr.f32.gmra.mrb[0].mxu0 %v135
    %v208 = vpop.f32.mrb[0].mxu0
    %v209 = vadd.f32 %v128, %v208
    %v210 = vpop.f32.mrb[0].mxu0
    %211 = vdwg.mxu0
    %212 = vst [vmem:[#allocation3] sm:$0xff] %v204
    %213 = vst [vmem:[#allocation3 + $0x8] sm:$0xff] %v209
    // Predicated region
    $region22: #{tpu_custom_call.1} parent=1 // pred_check
      _
    $region23: #{tpu_custom_call.1} parent=1 // pred_check_branch
      %215 = sbr.rel (0) target = $region25
    $region24: #{tpu_custom_call.1} parent=1 // pred_region
      %s217 = ssub.s32 256, 256
      %218 = vsyncadd [#allocation4], %s217
      %s219 = sshll.u32 [#allocation3], 4
      %s220 = int_to_ptr.vmem [resolvable:$true] %s219
      %225 = dma.vmem_to_hbm [thread:$0]  %s220, 256, %s4, [#allocation4], 128, 128, 8
    $region25: #{tpu_custom_call.1} parent=1 // pred_fallthru
      _
    // Predicated region
    $region26: #{tpu_custom_call.1} parent=1 // pred_check
      _
    $region27: #{tpu_custom_call.1} parent=1 // pred_check_branch
      %227 = sbr.rel (0) target = $region29
    $region28: #{tpu_custom_call.1} parent=1 // pred_region
      %228 = dma.done [#allocation4], 256
    $region29: #{tpu_custom_call.1} parent=1 // pred_fallthru
      _
    %229 = vsyncpa [#allocation4], 1

</llo_original>
